<compile_context>
chip_gen: v6e
topology: v6e:2x2x1
jax: 0.10.0
libtpu: 0.0.40
codegen_flags: <defaults>
</compile_context>

<pallas_src>
import math
import jax
import jax.numpy as jnp
from jax.experimental import pallas as pl
from jax.experimental.pallas import tpu as pltpu

# ------------------------- small synthetic config (CFG) ----------------------
B = 2                          # batch
C_IMG = 3                      # image channels
IMG = 16                       # spatial H = W
PATCH = 4                      # swin patch-embed patch size
P = (IMG // PATCH) ** 2        # tokens per image = 16
CP = C_IMG * PATCH * PATCH     # flattened patch features = 48
D_BACKBONE = 64                # backbone.head.in_features (swin embed dim stand-in)
FC_DIM = 32                    # CFG.fc_dim
N_CLASSES = 16                 # CFG.classes
FC_PAD = 128                   # fc dim zero-padded to a full 128-lane vreg width
NC_PAD = 128                   # class dim zero-padded -> lane-dense output store
SCALE = 30.0                   # CFG.scale
MARGIN = 0.5                   # CFG.margin
DROP_P = 0.1
BN_EPS = 1e-5
LN_EPS = 1e-5

COS_M = math.cos(MARGIN)
SIN_M = math.sin(MARGIN)
TH = math.cos(math.pi - MARGIN)
MM = math.sin(math.pi - MARGIN) * MARGIN


# ------------------------------ fused kernel ---------------------------------
def shopee_kernel(label_ref, patch_ref, drop_ref, wp_ref, bp_ref,
                  wc_ref, vec_ref, arc_w_ref, out_ref):
    # label_ref : SMEM (B,) int32
    # patch_ref : (B*P, CP)       bf16
    # drop_ref  : (B, D)          f32  dropout keep-mask {0,1}
    # wp_ref    : (CP, D)         bf16
    # bp_ref    : (1, D)          f32
    # wc_ref    : (D, FC_PAD)     bf16
    # vec_ref   : (3, FC_PAD)     f32  rows = [b_cls, bn_gamma, bn_beta]
    # arc_w_ref : (NC_PAD, FC_PAD) f32
    # out_ref   : (B, NC_PAD)     f32

    # --- backbone stand-in: patch-embed matmul (single 2-D bf16 MXU op) ---
    tok = jnp.dot(patch_ref[...], wp_ref[...],
                  preferred_element_type=jnp.float32)          # (B*P, D) f32
    tok = tok + bp_ref[...]

    # LayerNorm over embed dim (gamma=1, beta=0)
    mu = jnp.mean(tok, axis=-1, keepdims=True)
    var = jnp.mean(jnp.square(tok - mu), axis=-1, keepdims=True)
    tok = (tok - mu) * jax.lax.rsqrt(var + LN_EPS)

    # global token mean-pool per image (static, 8-aligned sublane slices)
    pooled = jnp.concatenate(
        [jnp.mean(tok[b * P:(b + 1) * P, :], axis=0, keepdims=True)
         for b in range(B)], axis=0)                           # (B, D)

    # --- nn.Dropout(p=0.1), training mode (precomputed keep-mask) ---
    x = pooled * drop_ref[...] * (1.0 / (1.0 - DROP_P))

    # --- self.classifier = nn.Linear(in_features, fc_dim) (bf16 MXU, f32 acc) ---
    x = jnp.dot(x.astype(jnp.bfloat16), wc_ref[...],
                preferred_element_type=jnp.float32)            # (B, FC_PAD)
    x = x + vec_ref[0:1, :]                                    # bias

    # --- self.bn = nn.BatchNorm1d(fc_dim), training statistics (biased var) ---
    bmu = jnp.mean(x, axis=0, keepdims=True)
    bvar = jnp.mean(jnp.square(x - bmu), axis=0, keepdims=True)
    x = (x - bmu) * jax.lax.rsqrt(bvar + BN_EPS)
    x = x * vec_ref[1:2, :] + vec_ref[2:3, :]

    # --- ArcMarginProduct: rsqrt-normalize, bf16 cosine matmul, margin blend ---
    xn = x * jax.lax.rsqrt(
        jnp.maximum(jnp.sum(jnp.square(x), axis=-1, keepdims=True), 1e-24))
    w = arc_w_ref[...]
    wn = w * jax.lax.rsqrt(
        jnp.maximum(jnp.sum(jnp.square(w), axis=-1, keepdims=True), 1e-24))
    cosine = jnp.einsum('bf,cf->bc',
                        xn.astype(jnp.bfloat16), wn.astype(jnp.bfloat16),
                        preferred_element_type=jnp.float32)    # (B, NC_PAD)

    sine = jnp.sqrt(jnp.maximum(1.0 - jnp.square(cosine), 0.0))  # clamp vs fp rounding
    phi = cosine * COS_M - sine * SIN_M
    phi = jnp.where(cosine > TH, phi, cosine - MM)             # easy_margin=False

    row_ids = jax.lax.broadcasted_iota(jnp.int32, (B, NC_PAD), 0)
    cls_ids = jax.lax.broadcasted_iota(jnp.int32, (B, NC_PAD), 1)
    one_hot = jnp.zeros((B, NC_PAD), jnp.float32)
    for b in range(B):                                         # B=2, static unroll
        one_hot = jnp.where((row_ids == b) & (cls_ids == label_ref[b]),
                            1.0, one_hot)

    out_ref[...] = (one_hot * phi + (1.0 - one_hot) * cosine) * SCALE


# ------------------------------- glue / params -------------------------------
def to_patches(img):
    # img NCHW (B, C, H, W) -> (B*P, C*p*p); patch flattened as (c, ph, pw)
    b, c, h, w = img.shape
    x = img.reshape(b, c, h // PATCH, PATCH, w // PATCH, PATCH)
    x = x.transpose(0, 2, 4, 1, 3, 5)                          # (B, hp, wp, C, p, p)
    return x.reshape(b * P, CP)


def init_params(key):
    k1, k2, k3 = jax.random.split(key, 3)
    # patch-embed conv(4x4, stride 4) as a matmul weight [CP, D] (trunc-normal-ish)
    w_patch = (jax.random.normal(k1, (CP, D_BACKBONE), jnp.float32) * 0.02
               ).astype(jnp.bfloat16)
    b_patch = jnp.zeros((1, D_BACKBONE), jnp.float32)

    # classifier: xavier_normal_ on torch weight [FC_DIM, D]; stored transposed,
    # zero-padded along the fc lane dim to 128.
    std = math.sqrt(2.0 / (D_BACKBONE + FC_DIM))
    w_cls = jax.random.normal(k2, (D_BACKBONE, FC_DIM), jnp.float32) * std
    w_cls = jnp.pad(w_cls, ((0, 0), (0, FC_PAD - FC_DIM))).astype(jnp.bfloat16)

    # packed per-feature vectors: rows = [classifier bias, bn gamma, bn beta]
    b_cls = jnp.zeros((FC_PAD,), jnp.float32)
    bn_g = jnp.pad(jnp.ones((FC_DIM,), jnp.float32), (0, FC_PAD - FC_DIM))
    bn_b = jnp.zeros((FC_PAD,), jnp.float32)
    vec = jnp.stack([b_cls, bn_g, bn_b], axis=0)               # (3, FC_PAD)

    # ArcMargin weight: xavier_uniform_ on (N_CLASSES, FC_DIM), zero-padded to
    # (NC_PAD, FC_PAD).  Padded class rows are all-zero -> cosine 0 -> sliced off.
    bound = math.sqrt(6.0 / (FC_DIM + N_CLASSES))
    arc_w = jax.random.uniform(k3, (N_CLASSES, FC_DIM), jnp.float32,
                               minval=-bound, maxval=bound)
    arc_w = jnp.pad(arc_w, ((0, NC_PAD - N_CLASSES), (0, FC_PAD - FC_DIM)))

    return dict(w_patch=w_patch, b_patch=b_patch, w_cls=w_cls,
                vec=vec, arc_w=arc_w)


def shopee_forward(image, label, dropout_key, params):
    # training-mode forward: logits = ArcMargin(BN(Linear(Dropout(backbone(x)))), label)
    patches = to_patches(image).astype(jnp.bfloat16)           # (B*P, CP)
    keep = jax.random.bernoulli(dropout_key, 1.0 - DROP_P,
                                (B, D_BACKBONE)).astype(jnp.float32)

    vmem = lambda: pl.BlockSpec(memory_space=pltpu.MemorySpace.VMEM)
    logits_padded = pl.pallas_call(
        shopee_kernel,
        out_shape=jax.ShapeDtypeStruct((B, NC_PAD), jnp.float32),
        in_specs=[
            pl.BlockSpec(memory_space=pltpu.MemorySpace.SMEM),  # label scalars
            vmem(),                                             # patches
            vmem(),                                             # dropout keep-mask
            vmem(),                                             # w_patch
            vmem(),                                             # b_patch
            vmem(),                                             # w_cls
            vmem(),                                             # packed vec params
            vmem(),                                             # arc_w
        ],
        out_specs=pl.BlockSpec(memory_space=pltpu.MemorySpace.VMEM),
    )(label, patches, keep, params["w_patch"], params["b_patch"],
      params["w_cls"], params["vec"], params["arc_w"])
    return logits_padded[:, :N_CLASSES]


# ----------------------------------- main -------------------------------------
if __name__ == "__main__":
    key = jax.random.PRNGKey(0)
    kimg, klbl, kdrop, kparam = jax.random.split(key, 4)

    image = jax.random.normal(kimg, (B, C_IMG, IMG, IMG), jnp.float32)  # NCHW
    label = jax.random.randint(klbl, (B,), 0, N_CLASSES, dtype=jnp.int32)
    params = init_params(kparam)

    logits = shopee_forward(image, label, kdrop, params)
    logits = jax.block_until_ready(logits)

    assert logits.shape == (B, N_CLASSES)
    assert bool(jnp.all(jnp.isfinite(logits)))
    print("KERNEL_OK")
</pallas_src>

<mosaic_0001>
module attributes {stable_mosaic.version = 11 : i64} {
  func.func @shopee_kernel(%arg0: memref<2xi32, #tpu.memory_space<smem>>, %arg1: memref<32x48xbf16, #tpu.memory_space<vmem>>, %arg2: memref<2x64xf32, #tpu.memory_space<vmem>>, %arg3: memref<48x64xbf16, #tpu.memory_space<vmem>>, %arg4: memref<1x64xf32, #tpu.memory_space<vmem>>, %arg5: memref<64x128xbf16, #tpu.memory_space<vmem>>, %arg6: memref<3x128xf32, #tpu.memory_space<vmem>>, %arg7: memref<128x128xf32, #tpu.memory_space<vmem>>, %arg8: memref<2x128xf32, #tpu.memory_space<vmem>>) attributes {dimension_semantics = [], scalar_prefetch = 0 : i64, scratch_operands = 0 : i64, tpu.core_type = #tpu.core_type<tc>} {
    %c0 = arith.constant 0 : index
    %c0_0 = arith.constant 0 : index
    %0 = vector.load %arg1[%c0, %c0_0] : memref<32x48xbf16, #tpu.memory_space<vmem>>, vector<32x48xbf16>
    %c0_1 = arith.constant 0 : index
    %c0_2 = arith.constant 0 : index
    %1 = vector.load %arg3[%c0_1, %c0_2] : memref<48x64xbf16, #tpu.memory_space<vmem>>, vector<48x64xbf16>
    %cst = arith.constant dense<0.000000e+00> : vector<32x64xf32>
    %2 = tpu.matmul %0, %1, %cst {dimension_numbers = #tpu.dot_dimension_numbers<[1], [0], [0], [1], [0, 0, 1, 1], [], []>} : vector<32x48xbf16>, vector<48x64xbf16>, vector<32x64xf32> -> vector<32x64xf32>
    %c0_3 = arith.constant 0 : index
    %c0_4 = arith.constant 0 : index
    %3 = vector.load %arg4[%c0_3, %c0_4] : memref<1x64xf32, #tpu.memory_space<vmem>>, vector<1x64xf32>
    %4 = vector.broadcast %3 : vector<1x64xf32> to vector<32x64xf32>
    %5 = arith.addf %2, %4 : vector<32x64xf32>
    %cst_5 = arith.constant dense<0.000000e+00> : vector<32xf32>
    %6 = vector.multi_reduction <add>, %5, %cst_5 [1] : vector<32x64xf32> to vector<32xf32>
    %7 = vector.shape_cast %6 : vector<32xf32> to vector<32x1xf32>
    %cst_6 = arith.constant 6.400000e+01 : f32
    %8 = vector.broadcast %cst_6 : f32 to vector<32x1xf32>
    %9 = arith.divf %7, %8 : vector<32x1xf32>
    %10 = vector.broadcast %9 : vector<32x1xf32> to vector<32x64xf32>
    %11 = arith.subf %5, %10 : vector<32x64xf32>
    %12 = arith.mulf %11, %11 : vector<32x64xf32>
    %cst_7 = arith.constant dense<0.000000e+00> : vector<32xf32>
    %13 = vector.multi_reduction <add>, %12, %cst_7 [1] : vector<32x64xf32> to vector<32xf32>
    %14 = vector.shape_cast %13 : vector<32xf32> to vector<32x1xf32>
    %cst_8 = arith.constant 6.400000e+01 : f32
    %15 = vector.broadcast %cst_8 : f32 to vector<32x1xf32>
    %16 = arith.divf %14, %15 : vector<32x1xf32>
    %17 = vector.broadcast %9 : vector<32x1xf32> to vector<32x64xf32>
    %18 = arith.subf %5, %17 : vector<32x64xf32>
    %cst_9 = arith.constant 9.99999974E-6 : f32
    %19 = vector.broadcast %cst_9 : f32 to vector<32x1xf32>
    %20 = arith.addf %16, %19 : vector<32x1xf32>
    %21 = math.rsqrt %20 : vector<32x1xf32>
    %22 = vector.broadcast %21 : vector<32x1xf32> to vector<32x64xf32>
    %23 = arith.mulf %18, %22 : vector<32x64xf32>
    %24 = vector.extract_strided_slice %23 {offsets = [0, 0], sizes = [16, 64], strides = [1, 1]} : vector<32x64xf32> to vector<16x64xf32>
    %cst_10 = arith.constant dense<0.000000e+00> : vector<64xf32>
    %25 = vector.multi_reduction <add>, %24, %cst_10 [0] : vector<16x64xf32> to vector<64xf32>
    %26 = vector.shape_cast %25 : vector<64xf32> to vector<1x64xf32>
    %cst_11 = arith.constant 1.600000e+01 : f32
    %27 = vector.broadcast %cst_11 : f32 to vector<1x64xf32>
    %28 = arith.divf %26, %27 : vector<1x64xf32>
    %29 = vector.extract_strided_slice %23 {offsets = [16, 0], sizes = [16, 64], strides = [1, 1]} : vector<32x64xf32> to vector<16x64xf32>
    %cst_12 = arith.constant dense<0.000000e+00> : vector<64xf32>
    %30 = vector.multi_reduction <add>, %29, %cst_12 [0] : vector<16x64xf32> to vector<64xf32>
    %31 = vector.shape_cast %30 : vector<64xf32> to vector<1x64xf32>
    %cst_13 = arith.constant 1.600000e+01 : f32
    %32 = vector.broadcast %cst_13 : f32 to vector<1x64xf32>
    %33 = arith.divf %31, %32 : vector<1x64xf32>
    %34 = tpu.concatenate %28, %33 in 0 : vector<1x64xf32>, vector<1x64xf32> -> vector<2x64xf32>
    %c0_14 = arith.constant 0 : index
    %c0_15 = arith.constant 0 : index
    %35 = vector.load %arg2[%c0_14, %c0_15] : memref<2x64xf32, #tpu.memory_space<vmem>>, vector<2x64xf32>
    %36 = arith.mulf %34, %35 : vector<2x64xf32>
    %cst_16 = arith.constant 1.11111116 : f32
    %37 = vector.broadcast %cst_16 : f32 to vector<2x64xf32>
    %38 = arith.mulf %36, %37 : vector<2x64xf32>
    %39 = arith.truncf %38 : vector<2x64xf32> to vector<2x64xbf16>
    %c0_17 = arith.constant 0 : index
    %c0_18 = arith.constant 0 : index
    %40 = vector.load %arg5[%c0_17, %c0_18] : memref<64x128xbf16, #tpu.memory_space<vmem>>, vector<64x128xbf16>
    %cst_19 = arith.constant dense<0.000000e+00> : vector<2x128xf32>
    %41 = tpu.matmul %39, %40, %cst_19 {dimension_numbers = #tpu.dot_dimension_numbers<[1], [0], [0], [1], [0, 0, 1, 1], [], []>} : vector<2x64xbf16>, vector<64x128xbf16>, vector<2x128xf32> -> vector<2x128xf32>
    %c0_20 = arith.constant 0 : index
    %c0_21 = arith.constant 0 : index
    %42 = vector.load %arg6[%c0_20, %c0_21] : memref<3x128xf32, #tpu.memory_space<vmem>>, vector<1x128xf32>
    %43 = vector.broadcast %42 : vector<1x128xf32> to vector<2x128xf32>
    %44 = arith.addf %41, %43 : vector<2x128xf32>
    %cst_22 = arith.constant dense<0.000000e+00> : vector<128xf32>
    %45 = vector.multi_reduction <add>, %44, %cst_22 [0] : vector<2x128xf32> to vector<128xf32>
    %46 = vector.shape_cast %45 : vector<128xf32> to vector<1x128xf32>
    %cst_23 = arith.constant 2.000000e+00 : f32
    %47 = vector.broadcast %cst_23 : f32 to vector<1x128xf32>
    %48 = arith.divf %46, %47 : vector<1x128xf32>
    %49 = vector.broadcast %48 : vector<1x128xf32> to vector<2x128xf32>
    %50 = arith.subf %44, %49 : vector<2x128xf32>
    %51 = arith.mulf %50, %50 : vector<2x128xf32>
    %cst_24 = arith.constant dense<0.000000e+00> : vector<128xf32>
    %52 = vector.multi_reduction <add>, %51, %cst_24 [0] : vector<2x128xf32> to vector<128xf32>
    %53 = vector.shape_cast %52 : vector<128xf32> to vector<1x128xf32>
    %cst_25 = arith.constant 2.000000e+00 : f32
    %54 = vector.broadcast %cst_25 : f32 to vector<1x128xf32>
    %55 = arith.divf %53, %54 : vector<1x128xf32>
    %56 = vector.broadcast %48 : vector<1x128xf32> to vector<2x128xf32>
    %57 = arith.subf %44, %56 : vector<2x128xf32>
    %cst_26 = arith.constant 9.99999974E-6 : f32
    %58 = vector.broadcast %cst_26 : f32 to vector<1x128xf32>
    %59 = arith.addf %55, %58 : vector<1x128xf32>
    %60 = math.rsqrt %59 : vector<1x128xf32>
    %61 = vector.broadcast %60 : vector<1x128xf32> to vector<2x128xf32>
    %62 = arith.mulf %57, %61 : vector<2x128xf32>
    %c1 = arith.constant 1 : index
    %c0_27 = arith.constant 0 : index
    %63 = vector.load %arg6[%c1, %c0_27] : memref<3x128xf32, #tpu.memory_space<vmem>>, vector<1x128xf32>
    %64 = vector.broadcast %63 : vector<1x128xf32> to vector<2x128xf32>
    %65 = arith.mulf %62, %64 : vector<2x128xf32>
    %c2 = arith.constant 2 : index
    %c0_28 = arith.constant 0 : index
    %66 = vector.load %arg6[%c2, %c0_28] : memref<3x128xf32, #tpu.memory_space<vmem>>, vector<1x128xf32>
    %67 = vector.broadcast %66 : vector<1x128xf32> to vector<2x128xf32>
    %68 = arith.addf %65, %67 : vector<2x128xf32>
    %69 = arith.mulf %68, %68 : vector<2x128xf32>
    %cst_29 = arith.constant dense<0.000000e+00> : vector<2xf32>
    %70 = vector.multi_reduction <add>, %69, %cst_29 [1] : vector<2x128xf32> to vector<2xf32>
    %71 = vector.shape_cast %70 : vector<2xf32> to vector<2x1xf32>
    %cst_30 = arith.constant 1.000000e-24 : f32
    %72 = vector.broadcast %cst_30 : f32 to vector<2x1xf32>
    %73 = arith.maximumf %71, %72 : vector<2x1xf32>
    %74 = math.rsqrt %73 : vector<2x1xf32>
    %75 = vector.broadcast %74 : vector<2x1xf32> to vector<2x128xf32>
    %76 = arith.mulf %68, %75 : vector<2x128xf32>
    %c0_31 = arith.constant 0 : index
    %c0_32 = arith.constant 0 : index
    %77 = vector.load %arg7[%c0_31, %c0_32] : memref<128x128xf32, #tpu.memory_space<vmem>>, vector<128x128xf32>
    %78 = arith.mulf %77, %77 : vector<128x128xf32>
    %cst_33 = arith.constant dense<0.000000e+00> : vector<128xf32>
    %79 = vector.multi_reduction <add>, %78, %cst_33 [1] : vector<128x128xf32> to vector<128xf32>
    %80 = vector.shape_cast %79 : vector<128xf32> to vector<128x1xf32>
    %cst_34 = arith.constant 1.000000e-24 : f32
    %81 = vector.broadcast %cst_34 : f32 to vector<128x1xf32>
    %82 = arith.maximumf %80, %81 : vector<128x1xf32>
    %83 = math.rsqrt %82 : vector<128x1xf32>
    %84 = vector.broadcast %83 : vector<128x1xf32> to vector<128x128xf32>
    %85 = arith.mulf %77, %84 : vector<128x128xf32>
    %86 = arith.truncf %76 : vector<2x128xf32> to vector<2x128xbf16>
    %87 = arith.truncf %85 : vector<128x128xf32> to vector<128x128xbf16>
    "tpu.trace_start"() <{level = 10 : i32, message = "bf,cf->bc"}> : () -> ()
    %cst_35 = arith.constant dense<0.000000e+00> : vector<2x128xf32>
    %88 = tpu.matmul %86, %87, %cst_35 {dimension_numbers = #tpu.dot_dimension_numbers<[1], [1], [0], [0], [0, 0, 1, 0], [], []>} : vector<2x128xbf16>, vector<128x128xbf16>, vector<2x128xf32> -> vector<2x128xf32>
    "tpu.trace_stop"() : () -> ()
    %89 = arith.mulf %88, %88 : vector<2x128xf32>
    %cst_36 = arith.constant 1.000000e+00 : f32
    %90 = vector.broadcast %cst_36 : f32 to vector<2x128xf32>
    %91 = arith.subf %90, %89 : vector<2x128xf32>
    %cst_37 = arith.constant 0.000000e+00 : f32
    %92 = vector.broadcast %cst_37 : f32 to vector<2x128xf32>
    %93 = arith.maximumf %91, %92 : vector<2x128xf32>
    %94 = math.sqrt %93 : vector<2x128xf32>
    %cst_38 = arith.constant 0.87758255 : f32
    %95 = vector.broadcast %cst_38 : f32 to vector<2x128xf32>
    %96 = arith.mulf %88, %95 : vector<2x128xf32>
    %cst_39 = arith.constant 0.47942555 : f32
    %97 = vector.broadcast %cst_39 : f32 to vector<2x128xf32>
    %98 = arith.mulf %94, %97 : vector<2x128xf32>
    %99 = arith.subf %96, %98 : vector<2x128xf32>
    %cst_40 = arith.constant -0.87758255 : f32
    %100 = vector.broadcast %cst_40 : f32 to vector<2x128xf32>
    %101 = arith.cmpf ogt, %88, %100 : vector<2x128xf32>
    %cst_41 = arith.constant 0.239712775 : f32
    %102 = vector.broadcast %cst_41 : f32 to vector<2x128xf32>
    %103 = arith.subf %88, %102 : vector<2x128xf32>
    %104 = arith.select %101, %99, %103 : vector<2x128xi1>, vector<2x128xf32>
    %105 = tpu.iota {dimensions = array<i32: 0>} : vector<2x128xi32>
    %106 = tpu.iota {dimensions = array<i32: 1>} : vector<2x128xi32>
    %cst_42 = arith.constant 0.000000e+00 : f32
    %107 = vector.broadcast %cst_42 : f32 to vector<2x128xf32>
    %c0_i32 = arith.constant 0 : i32
    %108 = vector.broadcast %c0_i32 : i32 to vector<2x128xi32>
    %109 = arith.cmpi eq, %105, %108 : vector<2x128xi32>
    %c0_43 = arith.constant 0 : index
    %110 = memref.load %arg0[%c0_43] : memref<2xi32, #tpu.memory_space<smem>>
    %111 = vector.broadcast %110 : i32 to vector<2x128xi32>
    %112 = arith.cmpi eq, %106, %111 : vector<2x128xi32>
    %113 = arith.andi %109, %112 : vector<2x128xi1>
    %cst_44 = arith.constant 1.000000e+00 : f32
    %114 = vector.broadcast %cst_44 : f32 to vector<2x128xf32>
    %115 = arith.select %113, %114, %107 : vector<2x128xi1>, vector<2x128xf32>
    %c1_i32 = arith.constant 1 : i32
    %116 = vector.broadcast %c1_i32 : i32 to vector<2x128xi32>
    %117 = arith.cmpi eq, %105, %116 : vector<2x128xi32>
    %c1_45 = arith.constant 1 : index
    %118 = memref.load %arg0[%c1_45] : memref<2xi32, #tpu.memory_space<smem>>
    %119 = vector.broadcast %118 : i32 to vector<2x128xi32>
    %120 = arith.cmpi eq, %106, %119 : vector<2x128xi32>
    %121 = arith.andi %117, %120 : vector<2x128xi1>
    %cst_46 = arith.constant 1.000000e+00 : f32
    %122 = vector.broadcast %cst_46 : f32 to vector<2x128xf32>
    %123 = arith.select %121, %122, %115 : vector<2x128xi1>, vector<2x128xf32>
    %124 = arith.mulf %123, %104 : vector<2x128xf32>
    %cst_47 = arith.constant 1.000000e+00 : f32
    %125 = vector.broadcast %cst_47 : f32 to vector<2x128xf32>
    %126 = arith.subf %125, %123 : vector<2x128xf32>
    %127 = arith.mulf %126, %88 : vector<2x128xf32>
    %128 = arith.addf %124, %127 : vector<2x128xf32>
    %cst_48 = arith.constant 3.000000e+01 : f32
    %129 = vector.broadcast %cst_48 : f32 to vector<2x128xf32>
    %130 = arith.mulf %128, %129 : vector<2x128xf32>
    %c0_49 = arith.constant 0 : index
    %c0_50 = arith.constant 0 : index
    %131 = vector.load %arg8[%c0_49, %c0_50] : memref<2x128xf32, #tpu.memory_space<vmem>>, vector<2x128xf32>
    tpu.vector_store %arg8[%c0_49, %c0_50], %130 {strides = array<i32>} : memref<2x128xf32, #tpu.memory_space<vmem>>, vector<2x128xf32>,
    return
  }
}

</mosaic_0001>

<llo_original>
// kernel: tpu_custom_call.1
$region0: #{tpu_custom_call.1}
  #allocation0 [shape = 'u32[]', space=smem, size = 0x4, offset = 0x4, fixed_abs, tag = 'smem constant byte address 0x4 - core index']
  #allocation1 [shape = 'u32[144,128]{1,0:T(1,128)}', space=vmem, size = 0x12000, scoped, tag = 'internal scratch']
  %s0 = inlined_call_operand.hbm [shape: s32[2], index: 0, kind: input, shape index: {}]
  %s1 = inlined_call_operand.hbm [shape: bf16[32,48], index: 1, kind: input, shape index: {}]
  %s2 = inlined_call_operand.vmem [shape: f32[2,64], index: 2, kind: input, shape index: {}]
  %s3 = inlined_call_operand.hbm [shape: bf16[48,64], index: 3, kind: input, shape index: {}]
  %s4 = inlined_call_operand.vmem [shape: f32[1,64], index: 4, kind: input, shape index: {}]
  %s5 = inlined_call_operand.hbm [shape: bf16[64,128], index: 5, kind: input, shape index: {}]
  %s6 = inlined_call_operand.vmem [shape: f32[3,128], index: 6, kind: input, shape index: {}]
  %s7 = inlined_call_operand.hbm [shape: f32[128,128], index: 7, kind: input, shape index: {}]
  %s8 = inlined_call_operand.hbm [shape: f32[2,128], index: 8, kind: output, shape index: {}]
  %s9 = sld [smem:[#allocation0]]
  $region62: #{tpu_custom_call.1} parent=0
    _
  %s11 = ssub.s32 1, %s9
  %s12 = scalar_select 0, %s11, %s9
  $region1: #{tpu_custom_call.1} parent=0
    #allocation2 [shape = 'u8[512]{0}', space=smem, size = 0x200, scoped, tag = 'input window, operand 0, single buffered']
    #allocation3 [shape = 's32[1]{0}', space=sflag, size = 0x4, scoped, tag = 'scoped memory for tpu_custom_call.1']
    #allocation4 [shape = 's32[1]{0}', space=sflag, size = 0x4, scoped, tag = 'scoped memory for tpu_custom_call.1']
    #allocation5 [shape = 's32[1]{0}', space=sflag, size = 0x4, scoped, tag = 'scoped memory for tpu_custom_call.1']
    #allocation6 [shape = 'u8[8192]{0}', space=vmem, size = 0x2000, scoped, tag = 'input window, operand 1, single buffered']
    #allocation7 [shape = 'u8[12288]{0}', space=vmem, size = 0x3000, scoped, tag = 'input window, operand 3, single buffered']
    #allocation8 [shape = 's32[1]{0}', space=sflag, size = 0x4, scoped, tag = 'scoped memory for tpu_custom_call.1']
    #allocation9 [shape = 'u8[16384]{0}', space=vmem, size = 0x4000, scoped, tag = 'input window, operand 5, single buffered']
    #allocation10 [shape = 'u8[65536]{0}', space=vmem, size = 0x10000, scoped, tag = 'input window, operand 7, single buffered']
    #allocation11 [shape = 's32[1]{0}', space=sflag, size = 0x4, scoped, tag = 'scoped memory for tpu_custom_call.1']
    #allocation12 [shape = 'u8[1024]{0}', space=vmem, size = 0x400, scoped, tag = 'output window, operand 0, single buffered']
    %13 = vsyncpa [#allocation5], 0
    %14 = vsyncpa [#allocation3], 0
    %15 = vsyncpa [#allocation8], 0
    %16 = vsyncpa [#allocation11], 0
    %17 = vsyncpa [#allocation4], 0
    // Predicated region
    $region2: #{tpu_custom_call.1} parent=1 // pred_check
      _
    $region3: #{tpu_custom_call.1} parent=1 // pred_check_branch
      %19 = sbr.rel (0) target = $region5
    $region4: #{tpu_custom_call.1} parent=1 // pred_region
      %s21 = ssub.s32 16, 16
      %22 = vsyncadd [#allocation5], %s21
      %25 = dma.hbm_to_smem %s0, 16, [#allocation2], [#allocation5]
    $region5: #{tpu_custom_call.1} parent=1 // pred_fallthru
      _
    // Predicated region
    $region6: #{tpu_custom_call.1} parent=1 // pred_check
      _
    $region7: #{tpu_custom_call.1} parent=1 // pred_check_branch
      %27 = sbr.rel (0) target = $region9
    $region8: #{tpu_custom_call.1} parent=1 // pred_region
      %s29 = ssub.s32 256, 256
      %30 = vsyncadd [#allocation3], %s29
      %s31 = sshll.u32 [#allocation6], 4
      %s32 = int_to_ptr.vmem [resolvable:$true] %s31
      %37 = dma.hbm_to_vmem [thread:$0]  %s1, 256, %s32, [#allocation3], 64, 64, 4
    $region9: #{tpu_custom_call.1} parent=1 // pred_fallthru
      _
    // Predicated region
    $region10: #{tpu_custom_call.1} parent=1 // pred_check
      _
    $region11: #{tpu_custom_call.1} parent=1 // pred_check_branch
      %39 = sbr.rel (0) target = $region13
    $region12: #{tpu_custom_call.1} parent=1 // pred_region
      _
    $region13: #{tpu_custom_call.1} parent=1 // pred_fallthru
      _
    // Predicated region
    $region14: #{tpu_custom_call.1} parent=1 // pred_check
      _
    $region15: #{tpu_custom_call.1} parent=1 // pred_check_branch
      %41 = sbr.rel (0) target = $region17
    $region16: #{tpu_custom_call.1} parent=1 // pred_region
      %s43 = ssub.s32 384, 384
      %44 = vsyncadd [#allocation8], %s43
      %s45 = sshll.u32 [#allocation7], 4
      %s46 = int_to_ptr.vmem [resolvable:$true] %s45
      %51 = dma.hbm_to_vmem [thread:$0]  %s3, 384, %s46, [#allocation8], 64, 64, 4
    $region17: #{tpu_custom_call.1} parent=1 // pred_fallthru
      _
    // Predicated region
    $region18: #{tpu_custom_call.1} parent=1 // pred_check
      _
    $region19: #{tpu_custom_call.1} parent=1 // pred_check_branch
      %53 = sbr.rel (0) target = $region21
    $region20: #{tpu_custom_call.1} parent=1 // pred_region
      _
    $region21: #{tpu_custom_call.1} parent=1 // pred_fallthru
      _
    // Predicated region
    $region22: #{tpu_custom_call.1} parent=1 // pred_check
      _
    $region23: #{tpu_custom_call.1} parent=1 // pred_check_branch
      %55 = sbr.rel (0) target = $region25
    $region24: #{tpu_custom_call.1} parent=1 // pred_region
      %s57 = ssub.s32 512, 512
      %58 = vsyncadd [#allocation8], %s57
      %s59 = sshll.u32 [#allocation9], 4
      %s60 = int_to_ptr.vmem [resolvable:$true] %s59
      %65 = dma.hbm_to_vmem [thread:$0]  %s5, 512, %s60, [#allocation8], 64, 64, 4
    $region25: #{tpu_custom_call.1} parent=1 // pred_fallthru
      _
    // Predicated region
    $region26: #{tpu_custom_call.1} parent=1 // pred_check
      _
    $region27: #{tpu_custom_call.1} parent=1 // pred_check_branch
      %67 = sbr.rel (0) target = $region29
    $region28: #{tpu_custom_call.1} parent=1 // pred_region
      _
    $region29: #{tpu_custom_call.1} parent=1 // pred_fallthru
      _
    // Predicated region
    $region30: #{tpu_custom_call.1} parent=1 // pred_check
      _
    $region31: #{tpu_custom_call.1} parent=1 // pred_check_branch
      %69 = sbr.rel (0) target = $region33
    $region32: #{tpu_custom_call.1} parent=1 // pred_region
      %s71 = ssub.s32 2048, 2048
      %72 = vsyncadd [#allocation11], %s71
      %s73 = sshll.u32 [#allocation10], 4
      %s74 = int_to_ptr.vmem [resolvable:$true] %s73
      %79 = dma.hbm_to_vmem [thread:$0]  %s7, 2048, %s74, [#allocation11], 128, 128, 8
    $region33: #{tpu_custom_call.1} parent=1 // pred_fallthru
      _
    // Predicated region
    $region34: #{tpu_custom_call.1} parent=1 // pred_check
      _
    $region35: #{tpu_custom_call.1} parent=1 // pred_check_branch
      %81 = sbr.rel (0) target = $region37
    $region36: #{tpu_custom_call.1} parent=1 // pred_region
      %82 = dma.done [#allocation5], 16
    $region37: #{tpu_custom_call.1} parent=1 // pred_fallthru
      _
    // Predicated region
    $region38: #{tpu_custom_call.1} parent=1 // pred_check
      _
    $region39: #{tpu_custom_call.1} parent=1 // pred_check_branch
      %84 = sbr.rel (0) target = $region41
    $region40: #{tpu_custom_call.1} parent=1 // pred_region
      %85 = dma.done [#allocation3], 256
    $region41: #{tpu_custom_call.1} parent=1 // pred_fallthru
      _
    // Predicated region
    $region42: #{tpu_custom_call.1} parent=1 // pred_check
      _
    $region43: #{tpu_custom_call.1} parent=1 // pred_check_branch
      %87 = sbr.rel (0) target = $region45
    $region44: #{tpu_custom_call.1} parent=1 // pred_region
      %88 = dma.done [#allocation8], 384
    $region45: #{tpu_custom_call.1} parent=1 // pred_fallthru
      _
    // Predicated region
    $region46: #{tpu_custom_call.1} parent=1 // pred_check
      _
    $region47: #{tpu_custom_call.1} parent=1 // pred_check_branch
      %90 = sbr.rel (0) target = $region49
    $region48: #{tpu_custom_call.1} parent=1 // pred_region
      %91 = dma.done [#allocation8], 512
    $region49: #{tpu_custom_call.1} parent=1 // pred_fallthru
      _
    // Predicated region
    $region50: #{tpu_custom_call.1} parent=1 // pred_check
      _
    $region51: #{tpu_custom_call.1} parent=1 // pred_check_branch
      %93 = sbr.rel (0) target = $region53
    $region52: #{tpu_custom_call.1} parent=1 // pred_region
      %94 = dma.done [#allocation11], 2048
    $region53: #{tpu_custom_call.1} parent=1 // pred_fallthru
      _
    %95 = sfence
    %v97 = vld [vmem:[#allocation6] sm:$0xf]
    %v98 = vld [vmem:[#allocation6 + $0x4] sm:$0xf]
    %v99 = vld [vmem:[#allocation6 + $0x8] sm:$0xf]
    %v100 = vld [vmem:[#allocation6 + $0xc] sm:$0xf]
    %v101 = vld [vmem:[#allocation7] sm:$0xf]
    %v102 = vld [vmem:[#allocation7 + $0x4] sm:$0xf]
    %v103 = vld [vmem:[#allocation7 + $0x8] sm:$0xf]
    %v104 = vld [vmem:[#allocation7 + $0xc] sm:$0xf]
    %v105 = vld [vmem:[#allocation7 + $0x10] sm:$0xf]
    %v106 = vld [vmem:[#allocation7 + $0x14] sm:$0xf]
    %v107 = vld [vmem:[%s4] sm:$0x1]
    %v109 = vlaneseq
    %v110 = vshrl.u32 %v109, 7
    %v111 = vsub.s32 0, %v110
    %v112 = vrot.slane %v107, %v111
    %v118 = vunpack.c.l.b16 %v97
    %v119 = vunpack.c.l.b16 %v98
    %v120 = vunpack.c.l.b16 %v99
    %v121 = vunpack.c.l.b16 %v100
    %v122 = vpack.c.b16 %v119, %v118
    %v123 = vpack.c.b16 %v121, %v120
    %v130 = vunpack.c.l.b16 %v101
    %v131 = vunpack.c.l.b16 %v102
    %v132 = vunpack.c.l.b16 %v103
    %v133 = vunpack.c.l.b16 %v104
    %v134 = vunpack.c.l.b16 %v105
    %v135 = vunpack.c.l.b16 %v106
    %v136 = vpack.c.b16 %v131, %v130
    %v137 = vpack.c.b16 %v133, %v132
    %v138 = vpack.c.b16 %v135, %v134
    %vm142 = vcmask 392192
    %v144 = vsel %vm142, %v122, 0
    %v147 = vsel %vm142, %v123, 0
    %149 = vmatprep.subr.bf16.mxu0 0
    %150 = vmatpush1.bf16.msra.mxu0 0
    %151 = vmatprep.subr.bf16.mxu0 0
    %152 = vmatpush1.bf16.msra.mxu0 0
    %153 = vmatprep.subr.bf16.mxu0 0
    %154 = vmatpush1.bf16.msra.mxu0 0
    %155 = vmatprep.subr.bf16.mxu0 0
    %156 = vmatpush1.bf16.msra.mxu0 0
    %157 = vmatprep.subr.bf16.mxu0 0
    %158 = vmatpush1.bf16.msra.mxu0 0
    %159 = vmatprep.subr.bf16.mxu0 0
    %160 = vmatpush1.bf16.msra.mxu0 %v138
    %161 = vmatprep.subr.bf16.mxu0 0
    %162 = vmatpush1.bf16.msra.mxu0 %v137
    %163 = vmatprep.subr.bf16.mxu0 0
    %164 = vmatpush1.bf16.msra.mxu0 %v136
    %165 = vmatprep.subr.bf16.mxu0 0
    %166 = vmatpush2.bf16.msra.mxu0 0
    %167 = vmatprep.subr.bf16.mxu0 0
    %168 = vmatpush2.bf16.msra.mxu0 0
    %169 = vmatprep.subr.bf16.mxu0 0
    %170 = vmatpush2.bf16.msra.mxu0 0
    %171 = vmatprep.subr.bf16.mxu0 0
    %172 = vmatpush2.bf16.msra.mxu0 0
    %173 = vmatprep.subr.bf16.mxu0 0
    %174 = vmatpush2.bf16.msra.mxu0 0
    %175 = vmatprep.subr.bf16.mxu0 0
    %176 = vmatpush2.bf16.msra.mxu0 0
    %177 = vmatprep.subr.bf16.mxu0 0
    %178 = vmatpush2.bf16.msra.mxu0 0
    %179 = vmatprep.subr.bf16.mxu0 0
    %180 = vmatpush2.bf16.msra.mxu0 0
    %181 = vmatprep.mubr.bf16.mxu0 0
    %182 = vmatmul.mubr.bf16.gmra.mxu0 %v144
    %v183 = vpop.f32.mrf.mxu0
    %v184 = vadd.f32 %v112, %v183
    %v185 = vpop.f32.mrf.mxu0
    %v186 = vpop.f32.mrf.mxu0
    %v187 = vadd.f32 %v112, %v186
    %v188 = vpop.f32.mrf.mxu0
    %189 = vmatprep.mubr.bf16.mxu0 0
    %190 = vmatmul.mubr.bf16.gmra.mxu0 %v147
    %v191 = vpop.f32.mrf.mxu0
    %v192 = vadd.f32 %v112, %v191
    %v193 = vpop.f32.mrf.mxu0
    %v194 = vpop.f32.mrf.mxu0
    %v195 = vadd.f32 %v112, %v194
    %v196 = vpop.f32.mrf.mxu0
    %197 = vdwg.mxu0
    %vm198 = vcmask 523264
    %v199 = vsel %vm198, %v184, 0.0
    %200 = vadd.xlane.f32.xlu0 %v199
    %v201 = vpop.xlane.xlu0 %200
    %v202 = vsel %vm198, %v187, 0.0
    %203 = vadd.xlane.f32.xlu0 %v202
    %v204 = vpop.xlane.xlu0 %203
    %v205 = vsel %vm198, %v192, 0.0
    %206 = vadd.xlane.f32.xlu0 %v205
    %v207 = vpop.xlane.xlu0 %206
    %v208 = vsel %vm198, %v195, 0.0
    %209 = vadd.xlane.f32.xlu0 %v208
    %v210 = vpop.xlane.xlu0 %209
    %v211 = vrcp.pop 64.0
    %v212 = vmul.f32 %v201, %v211
    %v213 = vmul.f32 %v204, %v211
    %v214 = vmul.f32 %v207, %v211
    %v215 = vmul.f32 %v210, %v211
    %v216 = vsub.f32 %v184, %v212
    %v217 = vsub.f32 %v187, %v213
    %v218 = vsub.f32 %v192, %v214
    %v219 = vsub.f32 %v195, %v215
    %v220 = vmul.f32 %v216, %v216
    %v221 = vmul.f32 %v217, %v217
    %v222 = vmul.f32 %v218, %v218
    %v223 = vmul.f32 %v219, %v219
    %v224 = vsel %vm198, %v220, 0.0
    %225 = vadd.xlane.f32.xlu0 %v224
    %v226 = vpop.xlane.xlu0 %225
    %v227 = vsel %vm198, %v221, 0.0
    %228 = vadd.xlane.f32.xlu0 %v227
    %v229 = vpop.xlane.xlu0 %228
    %v230 = vsel %vm198, %v222, 0.0
    %231 = vadd.xlane.f32.xlu0 %v230
    %v232 = vpop.xlane.xlu0 %231
    %v233 = vsel %vm198, %v223, 0.0
    %234 = vadd.xlane.f32.xlu0 %v233
    %v235 = vpop.xlane.xlu0 %234
    %v236 = vmul.f32 %v226, %v211
    %v237 = vmul.f32 %v229, %v211
    %v238 = vmul.f32 %v232, %v211
    %v239 = vmul.f32 %v235, %v211
    %v240 = vadd.f32 %v236, 1e-05
    %v241 = vadd.f32 %v237, 1e-05
    %v242 = vadd.f32 %v238, 1e-05
    %v243 = vadd.f32 %v239, 1e-05
    %v244 = vrsqrt.pop %v240
    %v245 = vrsqrt.pop %v241
    %v246 = vrsqrt.pop %v242
    %v247 = vrsqrt.pop %v243
    %v248 = vmul.f32 %v216, %v244
    %v249 = vmul.f32 %v217, %v245
    %v250 = vmul.f32 %v218, %v246
    %v251 = vmul.f32 %v219, %v247
    %v252 = vsel %vm198, %v248, 0.0
    %v253 = vsel %vm198, %v249, 0.0
    %v254 = vadd.f32 %v252, %v253
    %v255 = vrot.slane %v254, 4
    %v256 = vadd.f32 %v254, %v255
    %v257 = vrot.slane %v256, 2
    %v258 = vadd.f32 %v256, %v257
    %v259 = vrot.slane %v258, 1
    %v260 = vadd.f32 %v258, %v259
    %v261 = vrcp.pop 16.0
    %v262 = vmul.f32 %v260, %v261
    %v263 = vsel %vm198, %v250, 0.0
    %v264 = vsel %vm198, %v251, 0.0
    %v265 = vadd.f32 %v263, %v264
    %v266 = vrot.slane %v265, 4
    %v267 = vadd.f32 %v265, %v266
    %v268 = vrot.slane %v267, 2
    %v269 = vadd.f32 %v267, %v268
    %v270 = vrot.slane %v269, 1
    %v271 = vadd.f32 %v269, %v270
    %v272 = vmul.f32 %v271, %v261
    %vm273 = vcmask 1040384
    %v274 = vsel %vm273, %v262, %v272
    %v275 = vld [vmem:[%s2] sm:$0x3]
    %v276 = vmul.f32 %v274, %v275
    %v277 = vmul.f32 %v276, 1.1111112
    %v278 = vpack.c.bf16 %v277, %v277
    %v279 = vld [vmem:[#allocation9] sm:$0xf]
    %v280 = vld [vmem:[#allocation9 + $0x4] sm:$0xf]
    %v281 = vld [vmem:[#allocation9 + $0x8] sm:$0xf]
    %v282 = vld [vmem:[#allocation9 + $0xc] sm:$0xf]
    %v283 = vld [vmem:[#allocation9 + $0x10] sm:$0xf]
    %v284 = vld [vmem:[#allocation9 + $0x14] sm:$0xf]
    %v285 = vld [vmem:[#allocation9 + $0x18] sm:$0xf]
    %v286 = vld [vmem:[#allocation9 + $0x1c] sm:$0xf]
    %v287 = vld [vmem:[%s6] sm:$0x1]
    %v288 = vlaneseq
    %v289 = vshrl.u32 %v288, 7
    %v290 = vsub.s32 0, %v289
    %v291 = vrot.slane %v287, %v290
    %v300 = vunpack.c.l.b16 %v279
    %v301 = vunpack.c.l.b16 %v280
    %v302 = vunpack.c.l.b16 %v281
    %v303 = vunpack.c.l.b16 %v282
    %v304 = vunpack.c.l.b16 %v283
    %v305 = vunpack.c.l.b16 %v284
    %v306 = vunpack.c.l.b16 %v285
    %v307 = vunpack.c.l.b16 %v286
    %v308 = vpack.c.b16 %v301, %v300
    %v309 = vpack.c.b16 %v303, %v302
    %v310 = vpack.c.b16 %v305, %v304
    %v311 = vpack.c.b16 %v307, %v306
    %v317 = vsel %vm198, %v278, 0
    %319 = vmatprep.subr.bf16.mxu0 0
    %320 = vmatpush1.bf16.msra.mxu0 0
    %321 = vmatprep.subr.bf16.mxu0 0
    %322 = vmatpush1.bf16.msra.mxu0 0
    %323 = vmatprep.subr.bf16.mxu0 0
    %324 = vmatpush1.bf16.msra.mxu0 0
    %325 = vmatprep.subr.bf16.mxu0 0
    %326 = vmatpush1.bf16.msra.mxu0 0
    %327 = vmatprep.subr.bf16.mxu0 0
    %328 = vmatpush1.bf16.msra.mxu0 %v311
    %329 = vmatprep.subr.bf16.mxu0 0
    %330 = vmatpush1.bf16.msra.mxu0 %v310
    %331 = vmatprep.subr.bf16.mxu0 0
    %332 = vmatpush1.bf16.msra.mxu0 %v309
    %333 = vmatprep.subr.bf16.mxu0 0
    %334 = vmatpush1.bf16.msra.mxu0 %v308
    %335 = vmatprep.subr.bf16.mxu0 0
    %336 = vmatpush2.bf16.msra.mxu0 0
    %337 = vmatprep.subr.bf16.mxu0 0
    %338 = vmatpush2.bf16.msra.mxu0 0
    %339 = vmatprep.subr.bf16.mxu0 0
    %340 = vmatpush2.bf16.msra.mxu0 0
    %341 = vmatprep.subr.bf16.mxu0 0
    %342 = vmatpush2.bf16.msra.mxu0 0
    %343 = vmatprep.subr.bf16.mxu0 0
    %344 = vmatpush2.bf16.msra.mxu0 0
    %345 = vmatprep.subr.bf16.mxu0 0
    %346 = vmatpush2.bf16.msra.mxu0 0
    %347 = vmatprep.subr.bf16.mxu0 0
    %348 = vmatpush2.bf16.msra.mxu0 0
    %349 = vmatprep.subr.bf16.mxu0 0
    %350 = vmatpush2.bf16.msra.mxu0 0
    %351 = vmatprep.mubr.bf16.mxu0 0
    %352 = vmatmul.mubr.bf16.gmra.mxu0 %v317
    %v353 = vpop.f32.mrf.mxu0
    %v354 = vadd.f32 %v291, %v353
    %v355 = vpop.f32.mrf.mxu0
    %v356 = vpop.f32.mrf.mxu0
    %v357 = vpop.f32.mrf.mxu0
    %358 = vdwg.mxu0
    %vm359 = vcmask 1041408
    %v360 = vsel %vm359, %v354, 0.0
    %v361 = vrot.slane %v360, 4
    %v362 = vadd.f32 %v360, %v361
    %v363 = vrot.slane %v362, 2
    %v364 = vadd.f32 %v362, %v363
    %v365 = vrot.slane %v364, 1
    %v366 = vadd.f32 %v364, %v365
    %v367 = vrcp.pop 2.0
    %v368 = vmul.f32 %v366, %v367
    %v369 = vsub.f32 %v354, %v368
    %v370 = vmul.f32 %v369, %v369
    %v371 = vsel %vm359, %v370, 0.0
    %v372 = vrot.slane %v371, 4
    %v373 = vadd.f32 %v371, %v372
    %v374 = vrot.slane %v373, 2
    %v375 = vadd.f32 %v373, %v374
    %v376 = vrot.slane %v375, 1
    %v377 = vadd.f32 %v375, %v376
    %v378 = vmul.f32 %v377, %v367
    %v379 = vadd.f32 %v378, 1e-05
    %v380 = vrsqrt.pop %v379
    %v381 = vmul.f32 %v369, %v380
    %v382 = vld [vmem:[%s6 + $0x1] sm:$0x1]
    %v383 = vlaneseq
    %v384 = vshrl.u32 %v383, 7
    %v385 = vsub.s32 0, %v384
    %v386 = vrot.slane %v382, %v385
    %v387 = vmul.f32 %v381, %v386
    %v388 = vld [vmem:[%s6 + $0x2] sm:$0x1]
    %v389 = vlaneseq
    %v390 = vshrl.u32 %v389, 7
    %v391 = vsub.s32 0, %v390
    %v392 = vrot.slane %v388, %v391
    %v393 = vadd.f32 %v387, %v392
    %v394 = vmul.f32 %v393, %v393
    %v395 = vsel %vm359, %v394, 0.0
    %396 = vadd.xlane.f32.xlu0 %v395
    %v397 = vpop.xlane.xlu0 %396
    %v398 = vmax.f32 %v397, 1e-24
    %v399 = vrsqrt.pop %v398
    %v400 = vmul.f32 %v393, %v399
    %v401 = vld [vmem:[#allocation10] sm:$0xff]
    %v402 = vld [vmem:[#allocation10 + $0x8] sm:$0xff]
    %v403 = vld [vmem:[#allocation10 + $0x10] sm:$0xff]
    %v404 = vld [vmem:[#allocation10 + $0x18] sm:$0xff]
    %v405 = vld [vmem:[#allocation10 + $0x20] sm:$0xff]
    %v406 = vld [vmem:[#allocation10 + $0x28] sm:$0xff]
    %v407 = vld [vmem:[#allocation10 + $0x30] sm:$0xff]
    %v408 = vld [vmem:[#allocation10 + $0x38] sm:$0xff]
    %v409 = vld [vmem:[#allocation10 + $0x40] sm:$0xff]
    %v410 = vld [vmem:[#allocation10 + $0x48] sm:$0xff]
    %v411 = vld [vmem:[#allocation10 + $0x50] sm:$0xff]
    %v412 = vld [vmem:[#allocation10 + $0x58] sm:$0xff]
    %v413 = vld [vmem:[#allocation10 + $0x60] sm:$0xff]
    %v414 = vld [vmem:[#allocation10 + $0x68] sm:$0xff]
    %v415 = vld [vmem:[#allocation10 + $0x70] sm:$0xff]
    %v416 = vld [vmem:[#allocation10 + $0x78] sm:$0xff]
    %v417 = vmul.f32 %v401, %v401
    %v418 = vmul.f32 %v402, %v402
    %v419 = vmul.f32 %v403, %v403
    %v420 = vmul.f32 %v404, %v404
    %v421 = vmul.f32 %v405, %v405
    %v422 = vmul.f32 %v406, %v406
    %v423 = vmul.f32 %v407, %v407
    %v424 = vmul.f32 %v408, %v408
    %v425 = vmul.f32 %v409, %v409
    %v426 = vmul.f32 %v410, %v410
    %v427 = vmul.f32 %v411, %v411
    %v428 = vmul.f32 %v412, %v412
    %v429 = vmul.f32 %v413, %v413
    %v430 = vmul.f32 %v414, %v414
    %v431 = vmul.f32 %v415, %v415
    %v432 = vmul.f32 %v416, %v416
    %433 = vadd.xlane.f32.xlu0 %v417
    %v434 = vpop.xlane.xlu0 %433
    %435 = vadd.xlane.f32.xlu0 %v418
    %v436 = vpop.xlane.xlu0 %435
    %437 = vadd.xlane.f32.xlu0 %v419
    %v438 = vpop.xlane.xlu0 %437
    %439 = vadd.xlane.f32.xlu0 %v420
    %v440 = vpop.xlane.xlu0 %439
    %441 = vadd.xlane.f32.xlu0 %v421
    %v442 = vpop.xlane.xlu0 %441
    %443 = vadd.xlane.f32.xlu0 %v422
    %v444 = vpop.xlane.xlu0 %443
    %445 = vadd.xlane.f32.xlu0 %v423
    %v446 = vpop.xlane.xlu0 %445
    %447 = vadd.xlane.f32.xlu0 %v424
    %v448 = vpop.xlane.xlu0 %447
    %449 = vadd.xlane.f32.xlu0 %v425
    %v450 = vpop.xlane.xlu0 %449
    %451 = vadd.xlane.f32.xlu0 %v426
    %v452 = vpop.xlane.xlu0 %451
    %453 = vadd.xlane.f32.xlu0 %v427
    %v454 = vpop.xlane.xlu0 %453
    %455 = vadd.xlane.f32.xlu0 %v428
    %v456 = vpop.xlane.xlu0 %455
    %457 = vadd.xlane.f32.xlu0 %v429
    %v458 = vpop.xlane.xlu0 %457
    %459 = vadd.xlane.f32.xlu0 %v430
    %v460 = vpop.xlane.xlu0 %459
    %461 = vadd.xlane.f32.xlu0 %v431
    %v462 = vpop.xlane.xlu0 %461
    %463 = vadd.xlane.f32.xlu0 %v432
    %v464 = vpop.xlane.xlu0 %463
    %v465 = vmax.f32 %v434, 1e-24
    %v466 = vmax.f32 %v436, 1e-24
    %v467 = vmax.f32 %v438, 1e-24
    %v468 = vmax.f32 %v440, 1e-24
    %v469 = vmax.f32 %v442, 1e-24
    %v470 = vmax.f32 %v444, 1e-24
    %v471 = vmax.f32 %v446, 1e-24
    %v472 = vmax.f32 %v448, 1e-24
    %v473 = vmax.f32 %v450, 1e-24
    %v474 = vmax.f32 %v452, 1e-24
    %v475 = vmax.f32 %v454, 1e-24
    %v476 = vmax.f32 %v456, 1e-24
    %v477 = vmax.f32 %v458, 1e-24
    %v478 = vmax.f32 %v460, 1e-24
    %v479 = vmax.f32 %v462, 1e-24
    %v480 = vmax.f32 %v464, 1e-24
    %v481 = vrsqrt.pop %v465
    %v482 = vrsqrt.pop %v466
    %v483 = vrsqrt.pop %v467
    %v484 = vrsqrt.pop %v468
    %v485 = vrsqrt.pop %v469
    %v486 = vrsqrt.pop %v470
    %v487 = vrsqrt.pop %v471
    %v488 = vrsqrt.pop %v472
    %v489 = vrsqrt.pop %v473
    %v490 = vrsqrt.pop %v474
    %v491 = vrsqrt.pop %v475
    %v492 = vrsqrt.pop %v476
    %v493 = vrsqrt.pop %v477
    %v494 = vrsqrt.pop %v478
    %v495 = vrsqrt.pop %v479
    %v496 = vrsqrt.pop %v480
    %v497 = vmul.f32 %v401, %v481
    %v498 = vmul.f32 %v402, %v482
    %v499 = vmul.f32 %v403, %v483
    %v500 = vmul.f32 %v404, %v484
    %v501 = vmul.f32 %v405, %v485
    %v502 = vmul.f32 %v406, %v486
    %v503 = vmul.f32 %v407, %v487
    %v504 = vmul.f32 %v408, %v488
    %v505 = vmul.f32 %v409, %v489
    %v506 = vmul.f32 %v410, %v490
    %v507 = vmul.f32 %v411, %v491
    %v508 = vmul.f32 %v412, %v492
    %v509 = vmul.f32 %v413, %v493
    %v510 = vmul.f32 %v414, %v494
    %v511 = vmul.f32 %v415, %v495
    %v512 = vmul.f32 %v416, %v496
    %v513 = vpack.c.bf16 %v400, %v400
    %v514 = vpack.c.bf16 %v498, %v497
    %v515 = vpack.c.bf16 %v500, %v499
    %v516 = vpack.c.bf16 %v502, %v501
    %v517 = vpack.c.bf16 %v504, %v503
    %v518 = vpack.c.bf16 %v506, %v505
    %v519 = vpack.c.bf16 %v508, %v507
    %v520 = vpack.c.bf16 %v510, %v509
    %v521 = vpack.c.bf16 %v512, %v511
    %522 = vmatprep.subr.bf16.mxu0 0
    %523 = vmatpush1.bf16.xpose.msra.mxu0 %v521
    %524 = vmatprep.subr.bf16.mxu0 0
    %525 = vmatpush1.bf16.xpose.msra.mxu0 %v520
    %526 = vmatprep.subr.bf16.mxu0 0
    %527 = vmatpush1.bf16.xpose.msra.mxu0 %v519
    %528 = vmatprep.subr.bf16.mxu0 0
    %529 = vmatpush1.bf16.xpose.msra.mxu0 %v518
    %530 = vmatprep.subr.bf16.mxu0 0
    %531 = vmatpush1.bf16.xpose.msra.mxu0 %v517
    %532 = vmatprep.subr.bf16.mxu0 0
    %533 = vmatpush1.bf16.xpose.msra.mxu0 %v516
    %534 = vmatprep.subr.bf16.mxu0 0
    %535 = vmatpush1.bf16.xpose.msra.mxu0 %v515
    %536 = vmatprep.subr.bf16.mxu0 0
    %537 = vmatpush1.bf16.xpose.msra.mxu0 %v514
    %538 = vmatprep.subr.bf16.mxu0 0
    %539 = vmatpush2.bf16.xpose.msra.mxu0 0
    %540 = vmatprep.subr.bf16.mxu0 0
    %541 = vmatpush2.bf16.xpose.msra.mxu0 0
    %542 = vmatprep.subr.bf16.mxu0 0
    %543 = vmatpush2.bf16.xpose.msra.mxu0 0
    %544 = vmatprep.subr.bf16.mxu0 0
    %545 = vmatpush2.bf16.xpose.msra.mxu0 0
    %546 = vmatprep.subr.bf16.mxu0 0
    %547 = vmatpush2.bf16.xpose.msra.mxu0 0
    %548 = vmatprep.subr.bf16.mxu0 0
    %549 = vmatpush2.bf16.xpose.msra.mxu0 0
    %550 = vmatprep.subr.bf16.mxu0 0
    %551 = vmatpush2.bf16.xpose.msra.mxu0 0
    %552 = vmatprep.subr.bf16.mxu0 0
    %553 = vmatpush2.bf16.xpose.msra.mxu0 0
    %554 = vmatprep.mubr.bf16.mxu0 0
    %555 = vmatmul.mubr.bf16.gmra.mxu0 %v513
    %v556 = vpop.f32.mrf.mxu0
    %v557 = vadd.f32 0.0, %v556
    %v558 = vpop.f32.mrf.mxu0
    %v559 = vpop.f32.mrf.mxu0
    %v560 = vpop.f32.mrf.mxu0
    %561 = vdwg.mxu0
    %v562 = vmul.f32 %v557, %v557
    %v563 = vsub.f32 1.0, %v562
    %v564 = vmax.f32 %v563, 0.0
    %v565 = vrsqrt.pop %v564
    %v566 = vmul.f32 %v564, %v565
    %vm567 = vcmp.eq.f32.partialorder %v564, inf
    %v568 = vsel %vm567, %v564, %v566
    %vm569 = vcmp.eq.f32.partialorder %v564, 0.0
    %v570 = vand.u32 %v564, 2147483648
    %v571 = vsel %vm569, %v570, %v568
    %v572 = vmul.f32 %v557, 0.87758255
    %v573 = vmul.f32 %v571, 0.47942555
    %v574 = vsub.f32 %v572, %v573
    %vm575 = vcmp.gt.f32.partialorder %v557, -0.87758255
    %v576 = vsub.f32 %v557, 0.23971277
    %v577 = vsel %vm575, %v574, %v576
    %v578 = vlaneseq
    %v579 = vshrl.u32 %v578, 7
    %v580 = vlaneseq
    %v581 = vand.u32 %v580, 127
    %vm582 = vcmp.eq.s32.totalorder %v579, 0
    %s583 = sld [smem:[#allocation2]]
    %v584 = vstv %s583
    %vm585 = vcmp.eq.s32.totalorder %v581, %v584
    %vm586 = vmand %vm582, %vm585
    %v587 = vsel %vm586, 1.0, 0.0
    %vm588 = vcmp.eq.s32.totalorder %v579, 1
    %s589 = sld [smem:[#allocation2 + $0x1]]
    %v590 = vstv %s589
    %vm591 = vcmp.eq.s32.totalorder %v581, %v590
    %vm592 = vmand %vm588, %vm591
    %v593 = vsel %vm592, 1.0, %v587
    %v594 = vmul.f32 %v593, %v577
    %v595 = vsub.f32 1.0, %v593
    %v596 = vmul.f32 %v595, %v557
    %v597 = vadd.f32 %v594, %v596
    %v598 = vmul.f32 %v597, 30.0
    %599 = vst [vmem:[#allocation12] sm:$0x3] %v598
    // Predicated region
    $region54: #{tpu_custom_call.1} parent=1 // pred_check
      _
    $region55: #{tpu_custom_call.1} parent=1 // pred_check_branch
      %601 = sbr.rel (0) target = $region57
    $region56: #{tpu_custom_call.1} parent=1 // pred_region
      %s603 = ssub.s32 32, 32
      %604 = vsyncadd [#allocation4], %s603
      %s606 = sshll.u32 [#allocation12], 4
      %s607 = int_to_ptr.vmem [resolvable:$true] %s606
      %609 = dma.vmem_to_hbm [thread:$0]  %s607, 32, %s8, [#allocation4]
    $region57: #{tpu_custom_call.1} parent=1 // pred_fallthru
      _
    // Predicated region
    $region58: #{tpu_custom_call.1} parent=1 // pred_check
      _
    $region59: #{tpu_custom_call.1} parent=1 // pred_check_branch
      %611 = sbr.rel (0) target = $region61
    $region60: #{tpu_custom_call.1} parent=1 // pred_region
      %612 = dma.done [#allocation4], 32
    $region61: #{tpu_custom_call.1} parent=1 // pred_fallthru
      _
    %613 = vsyncpa [#allocation3], 1
    %614 = vsyncpa [#allocation8], 1
    %615 = vsyncpa [#allocation11], 1
    %616 = vsyncpa [#allocation4], 1
    %617 = vsyncpa [#allocation5], 1

</llo_original>
